<compile_context>
chip_gen: v5e
topology: v5e:2x2
jax: 0.10.0
libtpu: 0.0.40
codegen_flags: <defaults>
</compile_context>

<pallas_src>
import functools

import jax
import jax.numpy as jnp
from jax import lax
from jax.experimental import pallas as pl
from jax.experimental.pallas import tpu as pltpu


def _roll_lanes(v, shift):
    """Circular shift along the lane (last) axis.

    pltpu.roll is the XLU lane rotate and is used when the rotated dim is
    vreg-aligned; for small / unaligned M (e.g. M=16 here) the concat form of
    jnp.roll stays inside one vreg and always lowers.
    """
    m = v.shape[-1]
    if m % 128 == 0:
        return pltpu.roll(v, shift % m, axis=v.ndim - 1)
    return jnp.roll(v, shift, axis=-1)


def read_head_seq_kernel(x_ref, wt_ref, b_ref, mem_ref, winit_ref,
                         memread_ref, wout_ref, w_sc, invnm_sc, *, N):
    eps = 1e-16
    memory = mem_ref[...]                                   # [M, N]
    dn = (((1,), (1,)), ((), ()))                           # contract N of both operands

    @pl.when(pl.program_id(0) == 0)
    def _init():
        # Loop-invariant: 1 / max(||mem_row||, eps), row-oriented [1, M].
        # rsqrt(max(m2, eps^2)) == 1 / max(sqrt(m2), eps) exactly.
        m2 = lax.dot_general(jnp.ones((1, N), jnp.float32), memory * memory,
                             dn, preferred_element_type=jnp.float32)    # [1, M]
        invnm_sc[...] = lax.rsqrt(jnp.maximum(m2, eps * eps))
        w_sc[...] = winit_ref[...]                          # previous weights from caller

    x = x_ref[...]                                          # [1, C]
    Wp = wt_ref[...]                                        # [C, L] cols: [k(N)|beta gamma|g|s(3)]
    bp = b_ref[...]                                         # [1, L]
    w_last = w_sc[...]                                      # [1, M]

    # fc_read (MXU). Wp is loop-invariant and VMEM-resident across all T steps.
    # TODO(synk): keep Wp MXU-stationary via pltpu.matmul_push_rhs/matmul_acc_lhs
    # once shapes are tile-aligned; skipped for C=32, L=14.
    param = jnp.dot(x, Wp, preferred_element_type=jnp.float32) + bp     # [1, L]

    # grouped activations on contiguous slices (columns permuted at init)
    k = jnp.tanh(param[:, 0:N])                                         # [1, N]
    sp = jax.nn.softplus(param[:, N:N + 2])                             # [1, 2]
    beta = sp[:, 0:1]                                                   # [1, 1]
    gamma = 1.0 + sp[:, 1:2]                                            # [1, 1]
    g = jax.nn.sigmoid(param[:, N + 2:N + 3])                           # [1, 1]
    s_e = jnp.exp(param[:, N + 3:N + 6])        # 3-lane softmax; no max guard needed
    s = s_e / jnp.sum(s_e, axis=-1, keepdims=True)                      # [1, 3]

    # --- content addressing, row-oriented [1, M] ---
    dot_row = lax.dot_general(k, memory, dn,
                              preferred_element_type=jnp.float32)       # [1, M]
    inv_nk = lax.rsqrt(jnp.maximum(jnp.sum(k * k, axis=-1, keepdims=True),
                                   eps * eps))                          # [1, 1]
    cos = dot_row * invnm_sc[...] * inv_nk                              # [1, M]

    # softmax(beta * cos) over lanes (exact divide per correctness feedback)
    z = beta * cos
    ez = jnp.exp(z - jnp.max(z, axis=-1, keepdims=True))
    wc = ez / jnp.sum(ez, axis=-1, keepdims=True)                       # [1, M]

    # interpolate with previous weights (carried in VMEM scratch)
    wg = g * wc + (1.0 - g) * w_last                                    # [1, M]

    # circular shift: w_hat[i] = s0*wg[(i-1)%M] + s1*wg[i] + s2*wg[(i+1)%M]
    w_hat = (s[:, 0:1] * _roll_lanes(wg, 1)
             + s[:, 1:2] * wg
             + s[:, 2:3] * _roll_lanes(wg, -1))                         # [1, M]

    # sharpen: w_hat ** gamma / (sum + eps); final normalization exact so sum(w)==1
    w_pow = jnp.exp(gamma * jnp.log(jnp.maximum(w_hat, 1e-30)))         # [1, M]
    w = w_pow / (jnp.sum(w_pow, axis=-1, keepdims=True) + eps)          # [1, M]

    w_sc[...] = w                                                       # carry recurrence
    memread_ref[...] = jnp.dot(w, memory, preferred_element_type=jnp.float32)  # [1, N]
    wout_ref[...] = w


class ReadHeadPallas:
    """JAX/Pallas port of the PyTorch ReadHead (batch = 1), fused over T timesteps."""

    def __init__(self, M, N, controller_out, key):
        self.M, self.N, self.C = M, N, controller_out
        self.L = N + 6                                  # read_lengths = N + 1 + 1 + 3 + 1
        k1, k2 = jax.random.split(key)
        # xavier_uniform_(gain=1.4) on the torch [out, in] weight; stored as [in, out]
        fan_in, fan_out = controller_out, self.L
        gain = 1.4
        bound = gain * (6.0 / (fan_in + fan_out)) ** 0.5
        self.W = jax.random.uniform(k1, (fan_in, fan_out), jnp.float32, -bound, bound)
        self.b = (0.01 * jax.random.normal(k2, (fan_out,), jnp.float32)).reshape(1, fan_out)

        # Column permutation so grouped activations hit contiguous slices:
        # torch order [k(N), beta, g, s(3), gamma] -> kernel order [k(N), beta, gamma, g, s(3)]
        perm = jnp.array(list(range(N)) + [N, N + 5, N + 1, N + 2, N + 3, N + 4], jnp.int32)
        self._Wp = self.W[:, perm]
        self._bp = self.b[:, perm]

        self.w_last = jnp.zeros((1, M), jnp.float32)    # reset_memory()
        self._steps = {}                                # compiled fused call per T

    def _build(self, T):
        M, N, C, L = self.M, self.N, self.C, self.L
        kern = functools.partial(read_head_seq_kernel, N=N)
        call = pl.pallas_call(
            kern,
            out_shape=(jax.ShapeDtypeStruct((T, 1, N), jnp.float32),
                       jax.ShapeDtypeStruct((T, 1, M), jnp.float32)),
            grid_spec=pltpu.PrefetchScalarGridSpec(
                num_scalar_prefetch=0,
                grid=(T,),
                in_specs=[
                    pl.BlockSpec((None, 1, C), lambda t: (t, 0, 0)),  # x_t streamed per step
                    pl.BlockSpec((C, L), lambda t: (0, 0)),           # Wp: VMEM-resident
                    pl.BlockSpec((1, L), lambda t: (0, 0)),           # bp: VMEM-resident
                    pl.BlockSpec((M, N), lambda t: (0, 0)),           # memory: VMEM-resident
                    pl.BlockSpec((1, M), lambda t: (0, 0)),           # initial w_last
                ],
                out_specs=(pl.BlockSpec((None, 1, N), lambda t: (t, 0, 0)),
                           pl.BlockSpec((None, 1, M), lambda t: (t, 0, 0))),
                scratch_shapes=[pltpu.VMEM((1, M), jnp.float32),      # running w (recurrence)
                                pltpu.VMEM((1, M), jnp.float32)],     # 1/||mem_row|| invariant
            ),
            # Recurrence over T -> sequential grid axis.
            # TODO(synk): with >=2 independent heads / batch, add a leading
            # "parallel" grid axis to use both v7x TensorCores.
            compiler_params=pltpu.CompilerParams(
                dimension_semantics=("arbitrary",)),
        )

        @jax.jit
        def step(x_seq, Wp, bp, memory, w_init):
            mem_hist, w_hist = call(x_seq.reshape(T, 1, C), Wp, bp, memory, w_init)
            return mem_hist.reshape(T, N), w_hist.reshape(T, M)

        return step

    def __call__(self, x, memory):
        """x: [T, C] controller outputs (T >= 1). Returns (mem_read [T, N], w [T, M])."""
        T = x.shape[0]
        if T not in self._steps:
            self._steps[T] = self._build(T)
        mem_hist, w_hist = self._steps[T](x, self._Wp, self._bp, memory, self.w_last)
        self.w_last = w_hist[-1:]                       # emulate self.w_last.append(w)
        return mem_hist, w_hist


def read_head_ref(x, W, b, memory, w_last_row, N):
    """Pure-JAX single-step reference mirroring the PyTorch ReadHead.forward."""
    param = x @ W + b
    k = jnp.tanh(param[:, :N])
    beta = jax.nn.softplus(param[:, N:N + 1])
    g = jax.nn.sigmoid(param[:, N + 1:N + 2])
    s = jax.nn.softmax(param[:, N + 2:N + 5], axis=-1)
    gamma = 1.0 + jax.nn.softplus(param[:, N + 5:N + 6])
    eps = 1e-16
    dot = jnp.sum(memory * k, axis=-1)
    nm = jnp.sqrt(jnp.sum(memory * memory, axis=-1))
    nk = jnp.sqrt(jnp.sum(k * k))
    cos = dot / (jnp.maximum(nm, eps) * jnp.maximum(nk, eps))
    wc = jax.nn.softmax(beta * cos[None, :], axis=-1)
    wg = g * wc + (1.0 - g) * w_last_row
    wgf = wg[0]
    w_hat = s[0, 0] * jnp.roll(wgf, 1) + s[0, 1] * wgf + s[0, 2] * jnp.roll(wgf, -1)
    w_pow = w_hat ** gamma[0, 0]
    w = w_pow / (jnp.sum(w_pow) + eps)
    mem_read = w[None, :] @ memory
    return mem_read, w[None, :]


if __name__ == "__main__":
    M, N, C, T = 16, 8, 32, 8                # memory slots, slot width, controller_out, seq len
    key = jax.random.PRNGKey(0)
    kparam, kx, kmem = jax.random.split(key, 3)

    head = ReadHeadPallas(M, N, C, kparam)
    x_seq = jax.random.normal(kx, (T, C), jnp.float32)
    memory = jax.random.normal(kmem, (M, N), jnp.float32)

    # One fused call covers all T recurrent steps (w_last starts at zeros).
    mem_hist, w_hist = head(x_seq, memory)
    jax.block_until_ready((mem_hist, w_hist))
    assert mem_hist.shape == (T, N) and w_hist.shape == (T, M)

    # Per-step transfer check: step t must match the PyTorch math given the
    # kernel's own carried w_{t-1} (verifies both the math and the in-VMEM
    # recurrence wiring without compounding float noise across steps).
    w_prev = jnp.zeros((1, M), jnp.float32)
    for t in range(T):
        ref_mem, ref_w = read_head_ref(x_seq[t:t + 1], head.W, head.b, memory, w_prev, N)
        assert jnp.allclose(w_hist[t:t + 1], ref_w, atol=2e-3, rtol=2e-2), (
            t, float(jnp.max(jnp.abs(w_hist[t:t + 1] - ref_w))))
        assert jnp.allclose(mem_hist[t:t + 1], ref_mem, atol=2e-3, rtol=2e-2), (
            t, float(jnp.max(jnp.abs(mem_hist[t:t + 1] - ref_mem))))
        w_prev = w_hist[t:t + 1]

    # A second call (T = 1) continues from the carried (nonzero) w_last.
    carried = head.w_last
    x1 = jax.random.normal(jax.random.PRNGKey(1), (1, C), jnp.float32)
    mem1, w1 = head(x1, memory)
    jax.block_until_ready((mem1, w1))
    ref_mem1, ref_w1 = read_head_ref(x1, head.W, head.b, memory, carried, N)
    assert jnp.allclose(w1, ref_w1, atol=2e-3, rtol=2e-2)
    assert jnp.allclose(mem1, ref_mem1, atol=2e-3, rtol=2e-2)

    print("KERNEL_OK")
</pallas_src>

<mosaic_0001>
module attributes {stable_mosaic.version = 11 : i64} {
  func.func @read_head_seq_kernel(%arg0: i32, %arg1: memref<1x1x32xf32, #tpu.memory_space<vmem>>, %arg2: memref<32x14xf32, #tpu.memory_space<vmem>>, %arg3: memref<1x14xf32, #tpu.memory_space<vmem>>, %arg4: memref<16x8xf32, #tpu.memory_space<vmem>>, %arg5: memref<1x16xf32, #tpu.memory_space<vmem>>, %arg6: memref<1x1x8xf32, #tpu.memory_space<vmem>>, %arg7: memref<1x1x16xf32, #tpu.memory_space<vmem>>, %arg8: memref<1x16xf32, #tpu.memory_space<vmem>>, %arg9: memref<1x16xf32, #tpu.memory_space<vmem>>) attributes {dimension_semantics = [#tpu.dimension_semantics<arbitrary>], iteration_bounds = array<i64: 8>, scalar_prefetch = 0 : i64, scratch_operands = 2 : i64, tpu.core_type = #tpu.core_type<tc>, window_params = [{transform_indices = @transform_0, window_bounds = array<i64: 1, 1, 32>}, {pipeline_mode = #tpu.pipeline_mode<synchronous>, transform_indices = @transform_1, window_bounds = array<i64: 32, 14>}, {pipeline_mode = #tpu.pipeline_mode<synchronous>, transform_indices = @transform_2, window_bounds = array<i64: 1, 14>}, {pipeline_mode = #tpu.pipeline_mode<synchronous>, transform_indices = @transform_3, window_bounds = array<i64: 16, 8>}, {pipeline_mode = #tpu.pipeline_mode<synchronous>, transform_indices = @transform_4, window_bounds = array<i64: 1, 16>}, {transform_indices = @transform_5, window_bounds = array<i64: 1, 1, 8>}, {transform_indices = @transform_6, window_bounds = array<i64: 1, 1, 16>}]} {
    %c0 = arith.constant 0 : index
    %c0_0 = arith.constant 0 : index
    %0 = vector.load %arg4[%c0, %c0_0] : memref<16x8xf32, #tpu.memory_space<vmem>>, vector<16x8xf32>
    %c0_i32 = arith.constant 0 : i32
    %1 = arith.cmpi eq, %arg0, %c0_i32 : i32
    %2 = arith.extui %1 : i1 to i32
    %c0_i32_1 = arith.constant 0 : i32
    %3 = arith.cmpi ne, %2, %c0_i32_1 : i32
    scf.if %3 {
      %cst_36 = arith.constant 1.000000e+00 : f32
      %110 = vector.broadcast %cst_36 : f32 to vector<1x8xf32>
      %111 = arith.mulf %0, %0 : vector<16x8xf32>
      %cst_37 = arith.constant dense<0.000000e+00> : vector<1x16xf32>
      %112 = tpu.matmul %110, %111, %cst_37 {dimension_numbers = #tpu.dot_dimension_numbers<[1], [1], [0], [0], [0, 0, 1, 0], [], []>} : vector<1x8xf32>, vector<16x8xf32>, vector<1x16xf32> -> vector<1x16xf32>
      %cst_38 = arith.constant 1.000000e-32 : f32
      %113 = vector.broadcast %cst_38 : f32 to vector<1x16xf32>
      %114 = arith.maximumf %112, %113 : vector<1x16xf32>
      %115 = math.rsqrt %114 : vector<1x16xf32>
      %c0_39 = arith.constant 0 : index
      %c0_40 = arith.constant 0 : index
      %116 = vector.load %arg9[%c0_39, %c0_40] : memref<1x16xf32, #tpu.memory_space<vmem>>, vector<1x16xf32>
      tpu.vector_store %arg9[%c0_39, %c0_40], %115 {strides = array<i32>} : memref<1x16xf32, #tpu.memory_space<vmem>>, vector<1x16xf32>,
      %c0_41 = arith.constant 0 : index
      %c0_42 = arith.constant 0 : index
      %117 = vector.load %arg5[%c0_41, %c0_42] : memref<1x16xf32, #tpu.memory_space<vmem>>, vector<1x16xf32>
      %c0_43 = arith.constant 0 : index
      %c0_44 = arith.constant 0 : index
      %118 = vector.load %arg8[%c0_43, %c0_44] : memref<1x16xf32, #tpu.memory_space<vmem>>, vector<1x16xf32>
      tpu.vector_store %arg8[%c0_43, %c0_44], %117 {strides = array<i32>} : memref<1x16xf32, #tpu.memory_space<vmem>>, vector<1x16xf32>,
    } else {
    }
    %c0_2 = arith.constant 0 : index
    %c0_3 = arith.constant 0 : index
    %c0_4 = arith.constant 0 : index
    %4 = vector.load %arg1[%c0_2, %c0_3, %c0_4] : memref<1x1x32xf32, #tpu.memory_space<vmem>>, vector<1x1x32xf32>
    %5 = vector.shape_cast %4 : vector<1x1x32xf32> to vector<1x32xf32>
    %c0_5 = arith.constant 0 : index
    %c0_6 = arith.constant 0 : index
    %6 = vector.load %arg2[%c0_5, %c0_6] : memref<32x14xf32, #tpu.memory_space<vmem>>, vector<32x14xf32>
    %c0_7 = arith.constant 0 : index
    %c0_8 = arith.constant 0 : index
    %7 = vector.load %arg3[%c0_7, %c0_8] : memref<1x14xf32, #tpu.memory_space<vmem>>, vector<1x14xf32>
    %c0_9 = arith.constant 0 : index
    %c0_10 = arith.constant 0 : index
    %8 = vector.load %arg8[%c0_9, %c0_10] : memref<1x16xf32, #tpu.memory_space<vmem>>, vector<1x16xf32>
    %cst = arith.constant dense<0.000000e+00> : vector<1x14xf32>
    %9 = tpu.matmul %5, %6, %cst {dimension_numbers = #tpu.dot_dimension_numbers<[1], [0], [0], [1], [0, 0, 1, 1], [], []>} : vector<1x32xf32>, vector<32x14xf32>, vector<1x14xf32> -> vector<1x14xf32>
    %10 = arith.addf %9, %7 : vector<1x14xf32>
    %11 = vector.extract_strided_slice %10 {offsets = [0, 0], sizes = [1, 8], strides = [1, 1]} : vector<1x14xf32> to vector<1x8xf32>
    %12 = math.tanh %11 : vector<1x8xf32>
    %13 = vector.extract_strided_slice %10 {offsets = [0, 8], sizes = [1, 2], strides = [1, 1]} : vector<1x14xf32> to vector<1x2xf32>
    %cst_11 = arith.constant 0.000000e+00 : f32
    %14 = vector.broadcast %cst_11 : f32 to vector<1x2xf32>
    %15 = arith.maximumf %13, %14 : vector<1x2xf32>
    %16 = vector.broadcast %cst_11 : f32 to vector<1x2xf32>
    %17 = arith.subf %13, %16 : vector<1x2xf32>
    %18 = arith.cmpf one, %17, %17 : vector<1x2xf32>
    %19 = vector.broadcast %cst_11 : f32 to vector<1x2xf32>
    %20 = arith.addf %13, %19 : vector<1x2xf32>
    %21 = math.absf %17 : vector<1x2xf32>
    %cst_12 = arith.constant 0.000000e+00 : f32
    %22 = vector.broadcast %cst_12 : f32 to vector<1x2xf32>
    %23 = arith.subf %22, %21 : vector<1x2xf32>
    %24 = math.exp %23 : vector<1x2xf32>
    %25 = math.log1p %24 : vector<1x2xf32>
    %26 = arith.addf %15, %25 : vector<1x2xf32>
    %27 = arith.select %18, %20, %26 : vector<1x2xi1>, vector<1x2xf32>
    %28 = vector.extract_strided_slice %27 {offsets = [0, 0], sizes = [1, 1], strides = [1, 1]} : vector<1x2xf32> to vector<1x1xf32>
    %29 = vector.extract_strided_slice %27 {offsets = [0, 1], sizes = [1, 1], strides = [1, 1]} : vector<1x2xf32> to vector<1x1xf32>
    %cst_13 = arith.constant 1.000000e+00 : f32
    %30 = vector.broadcast %cst_13 : f32 to vector<1x1xf32>
    %31 = arith.addf %30, %29 : vector<1x1xf32>
    %32 = vector.extract_strided_slice %10 {offsets = [0, 10], sizes = [1, 1], strides = [1, 1]} : vector<1x14xf32> to vector<1x1xf32>
    %33 = arith.negf %32 : vector<1x1xf32>
    %34 = math.exp %33 : vector<1x1xf32>
    %cst_14 = arith.constant 1.000000e+00 : f32
    %35 = vector.broadcast %cst_14 : f32 to vector<1x1xf32>
    %36 = arith.addf %35, %34 : vector<1x1xf32>
    %37 = arith.divf %35, %36 : vector<1x1xf32>
    %38 = vector.extract_strided_slice %10 {offsets = [0, 11], sizes = [1, 3], strides = [1, 1]} : vector<1x14xf32> to vector<1x3xf32>
    %39 = math.exp %38 : vector<1x3xf32>
    %cst_15 = arith.constant dense<0.000000e+00> : vector<1xf32>
    %40 = vector.multi_reduction <add>, %39, %cst_15 [1] : vector<1x3xf32> to vector<1xf32>
    %41 = vector.shape_cast %40 : vector<1xf32> to vector<1x1xf32>
    %42 = vector.broadcast %41 : vector<1x1xf32> to vector<1x3xf32>
    %43 = arith.divf %39, %42 : vector<1x3xf32>
    %cst_16 = arith.constant dense<0.000000e+00> : vector<1x16xf32>
    %44 = tpu.matmul %12, %0, %cst_16 {dimension_numbers = #tpu.dot_dimension_numbers<[1], [1], [0], [0], [0, 0, 1, 0], [], []>} : vector<1x8xf32>, vector<16x8xf32>, vector<1x16xf32> -> vector<1x16xf32>
    %45 = arith.mulf %12, %12 : vector<1x8xf32>
    %cst_17 = arith.constant dense<0.000000e+00> : vector<1xf32>
    %46 = vector.multi_reduction <add>, %45, %cst_17 [1] : vector<1x8xf32> to vector<1xf32>
    %47 = vector.shape_cast %46 : vector<1xf32> to vector<1x1xf32>
    %cst_18 = arith.constant 1.000000e-32 : f32
    %48 = vector.broadcast %cst_18 : f32 to vector<1x1xf32>
    %49 = arith.maximumf %47, %48 : vector<1x1xf32>
    %50 = math.rsqrt %49 : vector<1x1xf32>
    %c0_19 = arith.constant 0 : index
    %c0_20 = arith.constant 0 : index
    %51 = vector.load %arg9[%c0_19, %c0_20] : memref<1x16xf32, #tpu.memory_space<vmem>>, vector<1x16xf32>
    %52 = arith.mulf %44, %51 : vector<1x16xf32>
    %53 = vector.broadcast %50 : vector<1x1xf32> to vector<1x16xf32>
    %54 = arith.mulf %52, %53 : vector<1x16xf32>
    %55 = vector.broadcast %28 : vector<1x1xf32> to vector<1x16xf32>
    %56 = arith.mulf %55, %54 : vector<1x16xf32>
    %cst_21 = arith.constant dense<0xFF800000> : vector<1xf32>
    %57 = vector.multi_reduction <maximumf>, %56, %cst_21 [1] : vector<1x16xf32> to vector<1xf32>
    %58 = vector.shape_cast %57 : vector<1xf32> to vector<1x1xf32>
    %59 = vector.broadcast %58 : vector<1x1xf32> to vector<1x16xf32>
    %60 = arith.subf %56, %59 : vector<1x16xf32>
    %61 = math.exp %60 : vector<1x16xf32>
    %cst_22 = arith.constant dense<0.000000e+00> : vector<1xf32>
    %62 = vector.multi_reduction <add>, %61, %cst_22 [1] : vector<1x16xf32> to vector<1xf32>
    %63 = vector.shape_cast %62 : vector<1xf32> to vector<1x1xf32>
    %64 = vector.broadcast %63 : vector<1x1xf32> to vector<1x16xf32>
    %65 = arith.divf %61, %64 : vector<1x16xf32>
    %66 = vector.broadcast %37 : vector<1x1xf32> to vector<1x16xf32>
    %67 = arith.mulf %66, %65 : vector<1x16xf32>
    %cst_23 = arith.constant 1.000000e+00 : f32
    %68 = vector.broadcast %cst_23 : f32 to vector<1x1xf32>
    %69 = arith.subf %68, %37 : vector<1x1xf32>
    %70 = vector.broadcast %69 : vector<1x1xf32> to vector<1x16xf32>
    %71 = arith.mulf %70, %8 : vector<1x16xf32>
    %72 = arith.addf %67, %71 : vector<1x16xf32>
    %73 = vector.extract_strided_slice %43 {offsets = [0, 0], sizes = [1, 1], strides = [1, 1]} : vector<1x3xf32> to vector<1x1xf32>
    %74 = vector.extract_strided_slice %72 {offsets = [0, 15], sizes = [1, 1], strides = [1, 1]} : vector<1x16xf32> to vector<1x1xf32>
    %75 = vector.extract_strided_slice %72 {offsets = [0, 0], sizes = [1, 15], strides = [1, 1]} : vector<1x16xf32> to vector<1x15xf32>
    %76 = tpu.concatenate %74, %75 in 1 : vector<1x1xf32>, vector<1x15xf32> -> vector<1x16xf32>
    %77 = vector.broadcast %73 : vector<1x1xf32> to vector<1x16xf32>
    %78 = arith.mulf %77, %76 : vector<1x16xf32>
    %79 = vector.extract_strided_slice %43 {offsets = [0, 1], sizes = [1, 1], strides = [1, 1]} : vector<1x3xf32> to vector<1x1xf32>
    %80 = vector.broadcast %79 : vector<1x1xf32> to vector<1x16xf32>
    %81 = arith.mulf %80, %72 : vector<1x16xf32>
    %82 = arith.addf %78, %81 : vector<1x16xf32>
    %83 = vector.extract_strided_slice %43 {offsets = [0, 2], sizes = [1, 1], strides = [1, 1]} : vector<1x3xf32> to vector<1x1xf32>
    %84 = vector.extract_strided_slice %72 {offsets = [0, 1], sizes = [1, 15], strides = [1, 1]} : vector<1x16xf32> to vector<1x15xf32>
    %85 = vector.extract_strided_slice %72 {offsets = [0, 0], sizes = [1, 1], strides = [1, 1]} : vector<1x16xf32> to vector<1x1xf32>
    %86 = tpu.concatenate %84, %85 in 1 : vector<1x15xf32>, vector<1x1xf32> -> vector<1x16xf32>
    %87 = vector.broadcast %83 : vector<1x1xf32> to vector<1x16xf32>
    %88 = arith.mulf %87, %86 : vector<1x16xf32>
    %89 = arith.addf %82, %88 : vector<1x16xf32>
    %cst_24 = arith.constant 1.000000e-30 : f32
    %90 = vector.broadcast %cst_24 : f32 to vector<1x16xf32>
    %91 = arith.maximumf %89, %90 : vector<1x16xf32>
    %92 = math.log %91 : vector<1x16xf32>
    %93 = vector.broadcast %31 : vector<1x1xf32> to vector<1x16xf32>
    %94 = arith.mulf %93, %92 : vector<1x16xf32>
    %95 = math.exp %94 : vector<1x16xf32>
    %cst_25 = arith.constant dense<0.000000e+00> : vector<1xf32>
    %96 = vector.multi_reduction <add>, %95, %cst_25 [1] : vector<1x16xf32> to vector<1xf32>
    %97 = vector.shape_cast %96 : vector<1xf32> to vector<1x1xf32>
    %cst_26 = arith.constant 1.000000e-16 : f32
    %98 = vector.broadcast %cst_26 : f32 to vector<1x1xf32>
    %99 = arith.addf %97, %98 : vector<1x1xf32>
    %100 = vector.broadcast %99 : vector<1x1xf32> to vector<1x16xf32>
    %101 = arith.divf %95, %100 : vector<1x16xf32>
    %c0_27 = arith.constant 0 : index
    %c0_28 = arith.constant 0 : index
    %102 = vector.load %arg8[%c0_27, %c0_28] : memref<1x16xf32, #tpu.memory_space<vmem>>, vector<1x16xf32>
    tpu.vector_store %arg8[%c0_27, %c0_28], %101 {strides = array<i32>} : memref<1x16xf32, #tpu.memory_space<vmem>>, vector<1x16xf32>,
    %cst_29 = arith.constant dense<0.000000e+00> : vector<1x8xf32>
    %103 = tpu.matmul %101, %0, %cst_29 {dimension_numbers = #tpu.dot_dimension_numbers<[1], [0], [0], [1], [0, 0, 1, 1], [], []>} : vector<1x16xf32>, vector<16x8xf32>, vector<1x8xf32> -> vector<1x8xf32>
    %c0_30 = arith.constant 0 : index
    %c0_31 = arith.constant 0 : index
    %c0_32 = arith.constant 0 : index
    %104 = vector.load %arg6[%c0_30, %c0_31, %c0_32] : memref<1x1x8xf32, #tpu.memory_space<vmem>>, vector<1x1x8xf32>
    %105 = vector.shape_cast %104 : vector<1x1x8xf32> to vector<1x8xf32>
    %106 = vector.shape_cast %103 : vector<1x8xf32> to vector<1x1x8xf32>
    tpu.vector_store %arg6[%c0_30, %c0_31, %c0_32], %106 {strides = array<i32>} : memref<1x1x8xf32, #tpu.memory_space<vmem>>, vector<1x1x8xf32>,
    %c0_33 = arith.constant 0 : index
    %c0_34 = arith.constant 0 : index
    %c0_35 = arith.constant 0 : index
    %107 = vector.load %arg7[%c0_33, %c0_34, %c0_35] : memref<1x1x16xf32, #tpu.memory_space<vmem>>, vector<1x1x16xf32>
    %108 = vector.shape_cast %107 : vector<1x1x16xf32> to vector<1x16xf32>
    %109 = vector.shape_cast %101 : vector<1x16xf32> to vector<1x1x16xf32>
    tpu.vector_store %arg7[%c0_33, %c0_34, %c0_35], %109 {strides = array<i32>} : memref<1x1x16xf32, #tpu.memory_space<vmem>>, vector<1x1x16xf32>,
    return
  }
  func.func @transform_0(%arg0: i32) -> (i32, i32, i32) {
    %c0_i32 = arith.constant 0 : i32
    %c0_i32_0 = arith.constant 0 : i32
    %c0_i32_1 = arith.constant 0 : i32
    return %arg0, %c0_i32, %c0_i32_0 : i32, i32, i32
  }
  func.func @transform_1(%arg0: i32) -> (i32, i32) {
    %c0_i32 = arith.constant 0 : i32
    %c0_i32_0 = arith.constant 0 : i32
    %c0_i32_1 = arith.constant 0 : i32
    return %c0_i32, %c0_i32_0 : i32, i32
  }
  func.func @transform_2(%arg0: i32) -> (i32, i32) {
    %c0_i32 = arith.constant 0 : i32
    %c0_i32_0 = arith.constant 0 : i32
    %c0_i32_1 = arith.constant 0 : i32
    return %c0_i32, %c0_i32_0 : i32, i32
  }
  func.func @transform_3(%arg0: i32) -> (i32, i32) {
    %c0_i32 = arith.constant 0 : i32
    %c0_i32_0 = arith.constant 0 : i32
    %c0_i32_1 = arith.constant 0 : i32
    return %c0_i32, %c0_i32_0 : i32, i32
  }
  func.func @transform_4(%arg0: i32) -> (i32, i32) {
    %c0_i32 = arith.constant 0 : i32
    %c0_i32_0 = arith.constant 0 : i32
    %c0_i32_1 = arith.constant 0 : i32
    return %c0_i32, %c0_i32_0 : i32, i32
  }
  func.func @transform_5(%arg0: i32) -> (i32, i32, i32) {
    %c0_i32 = arith.constant 0 : i32
    %c0_i32_0 = arith.constant 0 : i32
    %c0_i32_1 = arith.constant 0 : i32
    return %arg0, %c0_i32, %c0_i32_0 : i32, i32, i32
  }
  func.func @transform_6(%arg0: i32) -> (i32, i32, i32) {
    %c0_i32 = arith.constant 0 : i32
    %c0_i32_0 = arith.constant 0 : i32
    %c0_i32_1 = arith.constant 0 : i32
    return %arg0, %c0_i32, %c0_i32_0 : i32, i32, i32
  }
}

</mosaic_0001>

<llo_original>
// kernel: step.1
$region0: #{step.1}
  #allocation0 [shape = 'u32[]', space=smem, size = 0x4, offset = 0x4, fixed_abs, tag = 'smem constant byte address 0x4 - core index']
  #allocation1 [shape = 'u32[72,128]{1,0:T(1,128)}', space=vmem, size = 0x9000, scoped, tag = 'internal scratch']
  #allocation2 [shape = 'f32[1,16]{1,0:T(1,128)}', space=vmem, size = 0x200, scoped, tag = 'scratch operand']
  #allocation3 [shape = 'f32[1,16]{1,0:T(1,128)}', space=vmem, size = 0x200, scoped, tag = 'scratch operand']
  %s0 = inlined_call_operand.vmem [shape: f32[8,1,32], index: 0, kind: input, shape index: {}]
  %s1 = inlined_call_operand.vmem [shape: f32[32,14], index: 1, kind: input, shape index: {}]
  %s2 = inlined_call_operand.vmem [shape: f32[1,14], index: 2, kind: input, shape index: {}]
  %s3 = inlined_call_operand.vmem [shape: f32[16,8], index: 3, kind: input, shape index: {}]
  %s4 = inlined_call_operand.vmem [shape: f32[1,16], index: 4, kind: input, shape index: {}]
  %s5 = inlined_call_operand.hbm [shape: f32[8,1,8], index: 5, kind: output, shape index: {0}]
  %s6 = inlined_call_operand.hbm [shape: f32[8,1,16], index: 6, kind: output, shape index: {1}]
  %7 = xla_tuple %s5, %s6
  %s8 = sld [smem:[#allocation0]]
  $region65: #{step.1} parent=0
    _
  %s10 = ssub.s32 1, %s8
  %s11 = scalar_select 0, %s10, %s8
  $region1: #{step.1} parent=0
    #allocation4 [shape = 'u8[1024]{0}', space=vmem, size = 0x400, scoped, tag = 'output window, operand 0']
    #allocation5 [shape = 's32[2]{0}', space=sflag, size = 0x8, scoped, tag = 'scoped memory for step.1']
    #allocation6 [shape = 'u8[1024]{0}', space=vmem, size = 0x400, scoped, tag = 'output window, operand 1']
    #allocation7 [shape = 's32[2]{0}', space=sflag, size = 0x8, scoped, tag = 'scoped memory for step.1']
    %12 = vsyncpa [#allocation5], 0
    %s13 = scalar_lea.sflag [#allocation5], 1
    %14 = vsyncpa %s13, 0
    %15 = vsyncpa [#allocation7], 0
    %s16 = scalar_lea.sflag [#allocation7], 1
    %17 = vsyncpa %s16, 0
    loop: start=0, step=1, limit=10
    $region2: #{step.1} parent=1 // loop_pre_header
      _
    $region3: #{step.1} parent=1 // loop_header
      %s19 = sphi 0, %s23
      %p20 = scmp.ge.s32.totalorder %s19, 10
      %s29 = sphi 0, %s31
      %s32 = sphi 0, %s29
      %s33 = sphi 0, %s32
      %s49 = sphi 0, %s33
      %s53 = sphi 0, %s53
      %s55 = sphi 0, %s53
      %s56 = sphi 0, %s55
      %s70 = sphi 0, %s56
      %s74 = sphi 0, %s74
      %s76 = sphi 0, %s74
      %s77 = sphi 0, %s76
      %s91 = sphi 0, %s77
      %s95 = sphi 0, %s95
      %s97 = sphi 0, %s95
      %s98 = sphi 0, %s97
      %s112 = sphi 0, %s98
      %s116 = sphi 0, %s116
      %s118 = sphi 0, %s116
      %s119 = sphi 0, %s118
      %s133 = sphi 0, %s119
      %s139 = sphi 0, %s141
      %s142 = sphi 0, %s139
      %s143 = sphi 0, %s142
      %s159 = sphi 0, %s143
      %s165 = sphi 0, %s167
      %s168 = sphi 0, %s165
      %s169 = sphi 0, %s168
      %s185 = sphi 0, %s169
    $region4: #{step.1} parent=1 // loop_header_branch
      %22 = sbr.rel (%p20) target = $region8
    $region5: #{step.1} parent=1 // loop_body
      %s24 = ssub.s32 %s19, 1
      %s25 = ssub.s32 %s19, 2
      %s26 = sadd.s32 %s19, 1
      %s27 = ssub.s32 %s19, %s26
      %p28 = scmp.eq.s32.totalorder %s27, 0
      %s30 = sadd.s32 %s29, 1
      %s31 = scalar_select %p28, %s29, %s30
      %p34 = pneg %p28
      %p35 = scmp.eq.s32.totalorder %s19, 7
      %p36 = por %p34, %p35
      %p37 = scmp.ne.s32.totalorder %s29, %s32
      %p38 = scmp.eq.s32.totalorder %s19, 0
      %p39 = por %p37, %p38
      %p40 = scmp.ne.s32.totalorder %s29, %s32
      %p41 = scmp.eq.s32.totalorder %s24, 7
      %p42 = por %p40, %p41
      %p43 = scmp.ne.s32.totalorder %s32, %s33
      %p44 = scmp.eq.s32.totalorder %s24, 0
      %p45 = por %p43, %p44
      %p46 = scmp.ne.s32.totalorder %s32, %s33
      %p47 = scmp.eq.s32.totalorder %s25, 7
      %p48 = por %p46, %p47
      %p50 = scmp.ne.s32.totalorder %s33, %s49
      %p51 = scmp.eq.s32.totalorder %s25, 0
      %p52 = por %p50, %p51
      %s54 = sadd.s32 %s53, 1
      %p57 = scmp.eq.s32.totalorder %s19, 7
      %p58 = scmp.ne.s32.totalorder %s53, %s55
      %p59 = scmp.eq.s32.totalorder %s19, 0
      %p60 = por %p58, %p59
      %p61 = scmp.ne.s32.totalorder %s53, %s55
      %p62 = scmp.eq.s32.totalorder %s24, 7
      %p63 = por %p61, %p62
      %p64 = scmp.ne.s32.totalorder %s55, %s56
      %p65 = scmp.eq.s32.totalorder %s24, 0
      %p66 = por %p64, %p65
      %p67 = scmp.ne.s32.totalorder %s55, %s56
      %p68 = scmp.eq.s32.totalorder %s25, 7
      %p69 = por %p67, %p68
      %p71 = scmp.ne.s32.totalorder %s56, %s70
      %p72 = scmp.eq.s32.totalorder %s25, 0
      %p73 = por %p71, %p72
      %s75 = sadd.s32 %s74, 1
      %p78 = scmp.eq.s32.totalorder %s19, 7
      %p79 = scmp.ne.s32.totalorder %s74, %s76
      %p80 = scmp.eq.s32.totalorder %s19, 0
      %p81 = por %p79, %p80
      %p82 = scmp.ne.s32.totalorder %s74, %s76
      %p83 = scmp.eq.s32.totalorder %s24, 7
      %p84 = por %p82, %p83
      %p85 = scmp.ne.s32.totalorder %s76, %s77
      %p86 = scmp.eq.s32.totalorder %s24, 0
      %p87 = por %p85, %p86
      %p88 = scmp.ne.s32.totalorder %s76, %s77
      %p89 = scmp.eq.s32.totalorder %s25, 7
      %p90 = por %p88, %p89
      %p92 = scmp.ne.s32.totalorder %s77, %s91
      %p93 = scmp.eq.s32.totalorder %s25, 0
      %p94 = por %p92, %p93
      %s96 = sadd.s32 %s95, 1
      %p99 = scmp.eq.s32.totalorder %s19, 7
      %p100 = scmp.ne.s32.totalorder %s95, %s97
      %p101 = scmp.eq.s32.totalorder %s19, 0
      %p102 = por %p100, %p101
      %p103 = scmp.ne.s32.totalorder %s95, %s97
      %p104 = scmp.eq.s32.totalorder %s24, 7
      %p105 = por %p103, %p104
      %p106 = scmp.ne.s32.totalorder %s97, %s98
      %p107 = scmp.eq.s32.totalorder %s24, 0
      %p108 = por %p106, %p107
      %p109 = scmp.ne.s32.totalorder %s97, %s98
      %p110 = scmp.eq.s32.totalorder %s25, 7
      %p111 = por %p109, %p110
      %p113 = scmp.ne.s32.totalorder %s98, %s112
      %p114 = scmp.eq.s32.totalorder %s25, 0
      %p115 = por %p113, %p114
      %s117 = sadd.s32 %s116, 1
      %p120 = scmp.eq.s32.totalorder %s19, 7
      %p121 = scmp.ne.s32.totalorder %s116, %s118
      %p122 = scmp.eq.s32.totalorder %s19, 0
      %p123 = por %p121, %p122
      %p124 = scmp.ne.s32.totalorder %s116, %s118
      %p125 = scmp.eq.s32.totalorder %s24, 7
      %p126 = por %p124, %p125
      %p127 = scmp.ne.s32.totalorder %s118, %s119
      %p128 = scmp.eq.s32.totalorder %s24, 0
      %p129 = por %p127, %p128
      %p130 = scmp.ne.s32.totalorder %s118, %s119
      %p131 = scmp.eq.s32.totalorder %s25, 7
      %p132 = por %p130, %p131
      %p134 = scmp.ne.s32.totalorder %s119, %s133
      %p135 = scmp.eq.s32.totalorder %s25, 0
      %p136 = por %p134, %p135
      %s137 = ssub.s32 %s19, %s26
      %p138 = scmp.eq.s32.totalorder %s137, 0
      %s140 = sadd.s32 %s139, 1
      %s141 = scalar_select %p138, %s139, %s140
      %p144 = pneg %p138
      %p145 = scmp.eq.s32.totalorder %s19, 7
      %p146 = por %p144, %p145
      %p147 = scmp.ne.s32.totalorder %s139, %s142
      %p148 = scmp.eq.s32.totalorder %s19, 0
      %p149 = por %p147, %p148
      %p150 = scmp.ne.s32.totalorder %s139, %s142
      %p151 = scmp.eq.s32.totalorder %s24, 7
      %p152 = por %p150, %p151
      %p153 = scmp.ne.s32.totalorder %s142, %s143
      %p154 = scmp.eq.s32.totalorder %s24, 0
      %p155 = por %p153, %p154
      %p156 = scmp.ne.s32.totalorder %s142, %s143
      %p157 = scmp.eq.s32.totalorder %s25, 7
      %p158 = por %p156, %p157
      %p160 = scmp.ne.s32.totalorder %s143, %s159
      %p161 = scmp.eq.s32.totalorder %s25, 0
      %p162 = por %p160, %p161
      %s163 = ssub.s32 %s19, %s26
      %p164 = scmp.eq.s32.totalorder %s163, 0
      %s166 = sadd.s32 %s165, 1
      %s167 = scalar_select %p164, %s165, %s166
      %p170 = pneg %p164
      %p171 = scmp.eq.s32.totalorder %s19, 7
      %p172 = por %p170, %p171
      %p173 = scmp.ne.s32.totalorder %s165, %s168
      %p174 = scmp.eq.s32.totalorder %s19, 0
      %p175 = por %p173, %p174
      %p176 = scmp.ne.s32.totalorder %s165, %s168
      %p177 = scmp.eq.s32.totalorder %s24, 7
      %p178 = por %p176, %p177
      %p179 = scmp.ne.s32.totalorder %s168, %s169
      %p180 = scmp.eq.s32.totalorder %s24, 0
      %p181 = por %p179, %p180
      %p182 = scmp.ne.s32.totalorder %s168, %s169
      %p183 = scmp.eq.s32.totalorder %s25, 7
      %p184 = por %p182, %p183
      %p186 = scmp.ne.s32.totalorder %s169, %s185
      %p187 = scmp.eq.s32.totalorder %s25, 0
      %p188 = por %p186, %p187
      %p189 = scmp.le.s32.totalorder 1, %s19
      %p190 = scmp.lt.s32.totalorder %s19, 9
      %p191 = pnand %p189, %p190
      %p192 = pneg %p191
      // Predicated region
      $region9: #{step.1} parent=5 // pred_check
        _
      $region10: #{step.1} parent=5 // pred_check_branch
        %194 = sbr.rel (%p191) target = $region12
      $region11: #{step.1} parent=5 // pred_region
        %s195 = ssub.s32 %s19, 1
        // Predicated region
        $region13: #{step.1} parent=11 // pred_check
          %p196 = pneg %p66
        $region14: #{step.1} parent=11 // pred_check_branch
          %198 = sbr.rel (%p196) target = $region16
        $region15: #{step.1} parent=11 // pred_region
          _
        $region16: #{step.1} parent=11 // pred_fallthru
          _
        // Predicated region
        $region17: #{step.1} parent=11 // pred_check
          %p199 = pneg %p87
        $region18: #{step.1} parent=11 // pred_check_branch
          %201 = sbr.rel (%p199) target = $region20
        $region19: #{step.1} parent=11 // pred_region
          _
        $region20: #{step.1} parent=11 // pred_fallthru
          _
        // Predicated region
        $region21: #{step.1} parent=11 // pred_check
          %p202 = pneg %p108
        $region22: #{step.1} parent=11 // pred_check_branch
          %204 = sbr.rel (%p202) target = $region24
        $region23: #{step.1} parent=11 // pred_region
          _
        $region24: #{step.1} parent=11 // pred_fallthru
          _
        // Predicated region
        $region25: #{step.1} parent=11 // pred_check
          %p205 = pneg %p129
        $region26: #{step.1} parent=11 // pred_check_branch
          %207 = sbr.rel (%p205) target = $region28
        $region27: #{step.1} parent=11 // pred_region
          _
        $region28: #{step.1} parent=11 // pred_fallthru
          _
      $region12: #{step.1} parent=5 // pred_fallthru
        _
      %p208 = scmp.lt.s32.totalorder %s19, 8
      // Predicated region
      $region29: #{step.1} parent=5 // pred_check
        %p209 = pneg %p208
      $region30: #{step.1} parent=5 // pred_check_branch
        %211 = sbr.rel (%p209) target = $region32
      $region31: #{step.1} parent=5 // pred_region
        // Predicated region
        $region33: #{step.1} parent=31 // pred_check
          %p212 = pneg %p39
        $region34: #{step.1} parent=31 // pred_check_branch
          %214 = sbr.rel (%p212) target = $region36
        $region35: #{step.1} parent=31 // pred_region
          %p215 = scmp.lt.s32.totalorder %s19, 7
          %s216 = scalar_select %p215, %s19, 7
          %s217 = scalar_lea.vmem %s0, %s216
        $region36: #{step.1} parent=31 // pred_fallthru
          _
      $region32: #{step.1} parent=5 // pred_fallthru
        _
      %p218 = scmp.le.s32.totalorder 1, %s19
      %p219 = scmp.lt.s32.totalorder %s19, 9
      %p220 = pnand %p218, %p219
      %p221 = pneg %p220
      // Predicated region
      $region37: #{step.1} parent=5 // pred_check
        _
      $region38: #{step.1} parent=5 // pred_check_branch
        %223 = sbr.rel (%p220) target = $region40
      $region39: #{step.1} parent=5 // pred_region
        %s224 = ssub.s32 %s19, 1
        %p225 = scmp.lt.s32.totalorder %s24, 7
        %s226 = scalar_select %p225, %s24, 7
        %s227 = scalar_lea.vmem %s0, %s226
        %p228 = pneg %p45
        %p229 = pneg %p42
        %p230 = pneg %p66
        %p231 = pneg %p63
        %p232 = pneg %p87
        %p233 = pneg %p84
        %p234 = pneg %p108
        %p235 = pneg %p105
        %p236 = pneg %p129
        %p237 = pneg %p126
        %p238 = pneg %p155
        %p239 = pneg %p152
        %s240 = sand.u32 %s142, 1
        %s241 = scalar_lea.sflag [#allocation5], %s240
        %s242 = sand.u32 %s142, 1
        %s243 = scalar_lea.vmem [#allocation4], %s242
        %p244 = pneg %p181
        %p245 = pneg %p178
        %s246 = sand.u32 %s168, 1
        %s247 = scalar_lea.sflag [#allocation7], %s246
        %s248 = sand.u32 %s168, 1
        %s249 = scalar_lea.vmem [#allocation6], %s248
        %p250 = scmp.lt.s32.totalorder %s24, 7
        %s251 = scalar_select %p250, %s24, 7
        %s252 = scalar_lea.vmem %s0, %s251
        %v253 = vld [vmem:[%s3] sm:$0xff]
        %v254 = vld [vmem:[%s3 + $0x8] sm:$0xff]
        %p255 = scmp.eq.s32.totalorder %s24, 0
        // Predicated region
        $region41: #{step.1} parent=39 // pred_check
          %p256 = pneg %p255
        $region42: #{step.1} parent=39 // pred_check_branch
          %258 = sbr.rel (%p256) target = $region44
        $region43: #{step.1} parent=39 // pred_region
          %v259 = vmul.f32 %v253, %v253
          %v260 = vmul.f32 %v254, %v254
          %vm261 = vcmask 64512
          %v263 = vsel %vm261, 1.0, 0
          %v266 = vsel %vm261, %v259, 0
          %v269 = vsel %vm261, %v260, 0
          %271 = vmatpush.xpose.msra.mxu0 0.0
          %272 = vmatpush.xpose.msra.mxu0 0.0
          %273 = vmatpush.xpose.msra.mxu0 0.0
          %274 = vmatpush.xpose.msra.mxu0 0.0
          %275 = vmatpush.xpose.msra.mxu0 0.0
          %276 = vmatpush.xpose.msra.mxu0 0.0
          %277 = vmatpush.xpose.msra.mxu0 0.0
          %278 = vmatpush.xpose.msra.mxu0 0.0
          %279 = vmatpush.xpose.msra.mxu0 0.0
          %280 = vmatpush.xpose.msra.mxu0 0.0
          %281 = vmatpush.xpose.msra.mxu0 0.0
          %282 = vmatpush.xpose.msra.mxu0 0.0
          %283 = vmatpush.xpose.msra.mxu0 0.0
          %284 = vmatpush.xpose.msra.mxu0 0.0
          %285 = vmatpush.xpose.msra.mxu0 %v269
          %286 = vmatpush.xpose.msra.mxu0 %v266
          %287 = vmatmul.f32.gmra.mxu0 %v263
          %v288 = vpop.f32.mrf.mxu0
          %v289 = vadd.f32 0.0, %v288
          %290 = vdwg.mxu0
          %v291 = vmax.f32 %v289, 1e-32
          %v292 = vrsqrt.pop %v291
          %v293 = vmul.f32 %v292, %v291
          %v294 = vmul.f32 %v293, %v292
          %v295 = vmul.f32 0.5, %v294
          %v296 = vsub.f32 1.5, %v295
          %v297 = vmul.f32 %v292, %v296
          %vm298 = vweird.f32 %v291
          %vm299 = vweird.f32 %v292
          %vm300 = vmor %vm298, %vm299
          %v301 = vsel %vm300, %v292, %v297
          %vm302 = vcmask 122880
          %303 = vst.msk [vmem:[#allocation3] sm:$0x1] %vm302, %v301
          %v304 = vld [vmem:[%s4] sm:$0x1]
          %305 = vst.msk [vmem:[#allocation2] sm:$0x1] %vm302, %v304
        $region44: #{step.1} parent=39 // pred_fallthru
          _
        %v306 = vld [vmem:[%s252] sm:$0x1]
        %v307 = vld [vmem:[%s1] sm:$0xff]
        %v308 = vld [vmem:[%s1 + $0x8] sm:$0xff]
        %v309 = vld [vmem:[%s1 + $0x10] sm:$0xff]
        %v310 = vld [vmem:[%s1 + $0x18] sm:$0xff]
        %v311 = vld [vmem:[%s2] sm:$0x1]
        %v312 = vld [vmem:[#allocation2] sm:$0x1]
        %vm313 = vcmask 261120
        %v315 = vsel %vm313, %v306, 0
        %317 = vmatpush.msra.mxu0 0.0
        %318 = vmatpush.msra.mxu0 0.0
        %319 = vmatpush.msra.mxu0 0.0
        %320 = vmatpush.msra.mxu0 0.0
        %321 = vmatpush.msra.mxu0 0.0
        %322 = vmatpush.msra.mxu0 0.0
        %323 = vmatpush.msra.mxu0 0.0
        %324 = vmatpush.msra.mxu0 0.0
        %325 = vmatpush.msra.mxu0 0.0
        %326 = vmatpush.msra.mxu0 0.0
        %327 = vmatpush.msra.mxu0 0.0
        %328 = vmatpush.msra.mxu0 0.0
        %329 = vmatpush.msra.mxu0 %v310
        %330 = vmatpush.msra.mxu0 %v309
        %331 = vmatpush.msra.mxu0 %v308
        %332 = vmatpush.msra.mxu0 %v307
        %333 = vmatmul.f32.gmra.mxu0 %v315
        %v334 = vpop.f32.mrf.mxu0
        %v335 = vadd.f32 %v311, %v334
        %336 = vdwg.mxu0
        %v337 = vtanh.pop %v335
        %v338 = vmax.f32 %v335, 0.0
        %vm339 = vcmp.ne.f32.partialorder %v335, %v335
        %v340 = vadd.f32 %v335, 0.0
        %v341 = vand.u32 2147483647, %v335
        %v342 = vsub.f32 0.0, %v341
        %v343 = vmul.f32 %v342, 1.442695
        %v344 = vpow.pop %v343
        %v345 = vadd.f32 %v344, 1.0
        %v346 = vlog2.pop %v345
        %v347 = vmul.f32 %v346, 0.6931472
        %v348 = vmul.f32 -0.5, %v344
        %v349 = vadd.f32 %v348, 1.0
        %v350 = vmul.f32 %v349, %v344
        %v351 = vand.u32 2147483647, %v344
        %vm352 = vcmp.lt.f32.partialorder %v351, 0.0004427343
        %v353 = vsel %vm352, %v350, %v347
        %v354 = vadd.f32 %v338, %v353
        %v355 = vsel %vm339, %v340, %v354
        %v356 = vadd.f32 %v355, 1.0
        %v357 = vxor.u32 %v335, 2147483648
        %v358 = vmul.f32 %v357, 1.442695
        %v359 = vpow.pop %v358
        %v360 = vadd.f32 %v359, 1.0
        %v361 = vrcp.pop %v360
        %v362 = vmul.f32 %v360, %v361
        %v363 = vsub.f32 1.0, %v362
        %v364 = vmul.f32 %v361, %v363
        %v365 = vadd.f32 %v361, %v364
        %vm366 = vweird.f32 %v360
        %vm367 = vweird.f32 %v361
        %vm368 = vmor %vm366, %vm367
        %v369 = vsel %vm368, %v361, %v365
        %v370 = vand.u32 2147483647, %v360
        %vm371 = vcmp.eq.f32.partialorder %v370, 8.507059e+37
        %v372 = vand.u32 %v360, 2147483648
        %v373 = vor.u32 1.1754944e-38, %v372
        %v374 = vsel %vm371, %v373, %v369
        %v375 = vmul.f32 1.0, %v374
        %v376 = vmul.f32 %v335, 1.442695
        %v377 = vpow.pop %v376
        %379 = vrot.lane.b32.xlu0 %v377, 117
        %v380 = vpop.permute.xlu0 %379
        %vm382 = vcmask 16384
        %v383 = vsel %vm382, %v380, 0.0
        %384 = vadd.xlane.f32.xlu0 %v383
        %v385 = vpop.xlane.xlu0 %384
        %v386 = vrcp.pop %v385
        %v387 = vmul.f32 %v385, %v386
        %v388 = vsub.f32 1.0, %v387
        %v389 = vmul.f32 %v386, %v388
        %v390 = vadd.f32 %v386, %v389
        %vm391 = vweird.f32 %v385
        %vm392 = vweird.f32 %v386
        %vm393 = vmor %vm391, %vm392
        %v394 = vsel %vm393, %v386, %v390
        %v395 = vand.u32 2147483647, %v385
        %vm396 = vcmp.eq.f32.partialorder %v395, 8.507059e+37
        %v397 = vand.u32 %v385, 2147483648
        %v398 = vor.u32 1.1754944e-38, %v397
        %v399 = vsel %vm396, %v398, %v394
        %v400 = vmul.f32 %v377, %v399
        %vm401 = vcmask 64512
        %v403 = vsel %vm401, %v337, 0
        %v406 = vsel %vm401, %v253, 0
        %v409 = vsel %vm401, %v254, 0
        %411 = vmatpush.xpose.msra.mxu0 0.0
        %412 = vmatpush.xpose.msra.mxu0 0.0
        %413 = vmatpush.xpose.msra.mxu0 0.0
        %414 = vmatpush.xpose.msra.mxu0 0.0
        %415 = vmatpush.xpose.msra.mxu0 0.0
        %416 = vmatpush.xpose.msra.mxu0 0.0
        %417 = vmatpush.xpose.msra.mxu0 0.0
        %418 = vmatpush.xpose.msra.mxu0 0.0
        %419 = vmatpush.xpose.msra.mxu0 0.0
        %420 = vmatpush.xpose.msra.mxu0 0.0
        %421 = vmatpush.xpose.msra.mxu0 0.0
        %422 = vmatpush.xpose.msra.mxu0 0.0
        %423 = vmatpush.xpose.msra.mxu0 0.0
        %424 = vmatpush.xpose.msra.mxu0 0.0
        %425 = vmatpush.xpose.msra.mxu0 %v409
        %426 = vmatpush.xpose.msra.mxu0 %v406
        %427 = vmatmul.f32.gmra.mxu0 %v403
        %v428 = vpop.f32.mrf.mxu0
        %v429 = vadd.f32 0.0, %v428
        %430 = vdwg.mxu0
        %v431 = vmul.f32 %v337, %v337
        %vm432 = vcmask 57344
        %v433 = vsel %vm432, %v431, 0.0
        %434 = vadd.xlane.f32.xlu0 %v433
        %v435 = vpop.xlane.xlu0 %434
        %v436 = vmax.f32 %v435, 1e-32
        %v437 = vrsqrt.pop %v436
        %v438 = vmul.f32 %v437, %v436
        %v439 = vmul.f32 %v438, %v437
        %v440 = vmul.f32 0.5, %v439
        %v441 = vsub.f32 1.5, %v440
        %v442 = vmul.f32 %v437, %v441
        %vm443 = vweird.f32 %v436
        %vm444 = vweird.f32 %v437
        %vm445 = vmor %vm443, %vm444
        %v446 = vsel %vm445, %v437, %v442
        %v447 = vld [vmem:[#allocation3] sm:$0x1]
        %v448 = vmul.f32 %v429, %v447
        %v449 = vmul.f32 %v448, %v446
        %451 = vset.pattern.permute.xlu0 8
        %452 = vperm.xlu0 %451, %v355
        %v453 = vpop.permute.xlu0 %452
        %v455 = vmul.f32 %v453, %v449
        %vm456 = vcmask 122880
        %v457 = vsel %vm456, %v455, -inf
        %458 = vmax.xlane.f32.xlu0 %v457
        %v459 = vpop.xlane.xlu0 %458
        %v460 = vsub.f32 %v455, %v459
        %v461 = vmul.f32 %v460, 1.442695
        %v462 = vpow.pop %v461
        %v463 = vsel %vm456, %v462, 0.0
        %464 = vadd.xlane.f32.xlu0 %v463
        %v465 = vpop.xlane.xlu0 %464
        %v466 = vrcp.pop %v465
        %v467 = vmul.f32 %v465, %v466
        %v468 = vsub.f32 1.0, %v467
        %v469 = vmul.f32 %v466, %v468
        %v470 = vadd.f32 %v466, %v469
        %vm471 = vweird.f32 %v465
        %vm472 = vweird.f32 %v466
        %vm473 = vmor %vm471, %vm472
        %v474 = vsel %vm473, %v466, %v470
        %v475 = vand.u32 2147483647, %v465
        %vm476 = vcmp.eq.f32.partialorder %v475, 8.507059e+37
        %v477 = vand.u32 %v465, 2147483648
        %v478 = vor.u32 1.1754944e-38, %v477
        %v479 = vsel %vm476, %v478, %v474
        %v480 = vmul.f32 %v462, %v479
        %482 = vset.pattern.permute.xlu0 10
        %483 = vperm.xlu0 %482, %v375
        %v484 = vpop.permute.xlu0 %483
        %v486 = vmul.f32 %v484, %v480
        %v487 = vsub.f32 1.0, %v375
        %489 = vset.pattern.permute.xlu0 10
        %490 = vperm.xlu0 %489, %v487
        %v491 = vpop.permute.xlu0 %490
        %v493 = vmul.f32 %v491, %v312
        %v494 = vadd.f32 %v486, %v493
        %496 = vrot.lane.b32.xlu0 %v494, 113
        %v497 = vpop.permute.xlu0 %496
        %499 = vrot.lane.b32.xlu0 %v494, 1
        %v500 = vpop.permute.xlu0 %499
        %vm502 = vcmask 7168
        %v503 = vsel %vm502, %v497, %v500
        %505 = vset.pattern.permute.xlu0 11
        %506 = vperm.xlu0 %505, %v400
        %v507 = vpop.permute.xlu0 %506
        %v509 = vmul.f32 %v507, %v503
        %510 = vset.pattern.permute.xlu0 12
        %511 = vperm.xlu0 %510, %v400
        %v512 = vpop.permute.xlu0 %511
        %v514 = vmul.f32 %v512, %v494
        %v515 = vadd.f32 %v509, %v514
        %516 = vrot.lane.b32.xlu0 %v494, 127
        %v517 = vpop.permute.xlu0 %516
        %519 = vrot.lane.b32.xlu0 %v494, 15
        %v520 = vpop.permute.xlu0 %519
        %vm522 = vcmask 121856
        %v523 = vsel %vm522, %v517, %v520
        %524 = vset.pattern.permute.xlu0 13
        %525 = vperm.xlu0 %524, %v400
        %v526 = vpop.permute.xlu0 %525
        %v528 = vmul.f32 %v526, %v523
        %v529 = vadd.f32 %v515, %v528
        %v530 = vmax.f32 %v529, 1e-30
        %v531 = vlog2.pop %v530
        %v532 = vmul.f32 %v531, 0.6931472
        %534 = vset.pattern.permute.xlu0 9
        %535 = vperm.xlu0 %534, %v356
        %v536 = vpop.permute.xlu0 %535
        %v538 = vmul.f32 %v536, %v532
        %v539 = vmul.f32 %v538, 1.442695
        %v540 = vpow.pop %v539
        %v541 = vsel %vm456, %v540, 0.0
        %542 = vadd.xlane.f32.xlu0 %v541
        %v543 = vpop.xlane.xlu0 %542
        %v544 = vadd.f32 %v543, 1e-16
        %v545 = vrcp.pop %v544
        %v546 = vmul.f32 %v544, %v545
        %v547 = vsub.f32 1.0, %v546
        %v548 = vmul.f32 %v545, %v547
        %v549 = vadd.f32 %v545, %v548
        %vm550 = vweird.f32 %v544
        %vm551 = vweird.f32 %v545
        %vm552 = vmor %vm550, %vm551
        %v553 = vsel %vm552, %v545, %v549
        %v554 = vand.u32 2147483647, %v544
        %vm555 = vcmp.eq.f32.partialorder %v554, 8.507059e+37
        %v556 = vand.u32 %v544, 2147483648
        %v557 = vor.u32 1.1754944e-38, %v556
        %v558 = vsel %vm555, %v557, %v553
        %v559 = vmul.f32 %v540, %v558
        %560 = vst.msk [vmem:[#allocation2] sm:$0x1] %vm456, %v559
        %vm561 = vcmask 130048
        %v563 = vsel %vm561, %v559, 0
        %565 = vmatpush.msra.mxu0 0.0
        %566 = vmatpush.msra.mxu0 0.0
        %567 = vmatpush.msra.mxu0 0.0
        %568 = vmatpush.msra.mxu0 0.0
        %569 = vmatpush.msra.mxu0 0.0
        %570 = vmatpush.msra.mxu0 0.0
        %571 = vmatpush.msra.mxu0 0.0
        %572 = vmatpush.msra.mxu0 0.0
        %573 = vmatpush.msra.mxu0 0.0
        %574 = vmatpush.msra.mxu0 0.0
        %575 = vmatpush.msra.mxu0 0.0
        %576 = vmatpush.msra.mxu0 0.0
        %577 = vmatpush.msra.mxu0 0.0
        %578 = vmatpush.msra.mxu0 0.0
        %579 = vmatpush.msra.mxu0 %v254
        %580 = vmatpush.msra.mxu0 %v253
        %581 = vmatmul.f32.gmra.mxu0 %v563
        %v582 = vpop.f32.mrf.mxu0
        %v583 = vadd.f32 0.0, %v582
        %584 = vdwg.mxu0
        %585 = vst.msk [vmem:[%s243] sm:$0x1] %vm432, %v583
        %586 = vst.msk [vmem:[%s249] sm:$0x1] %vm456, %v559
        %s587 = sand.u32 %s142, 1
        %s588 = scalar_lea.sflag [#allocation5], %s587
        %s589 = sand.u32 %s142, 1
        %s590 = scalar_lea.vmem [#allocation4], %s589
        %s591 = sand.u32 %s168, 1
        %s592 = scalar_lea.sflag [#allocation7], %s591
        %s593 = sand.u32 %s168, 1
        %s594 = scalar_lea.vmem [#allocation6], %s593
        // Predicated region
        $region45: #{step.1} parent=39 // pred_check
          %p595 = pneg %p152
        $region46: #{step.1} parent=39 // pred_check_branch
          %597 = sbr.rel (%p595) target = $region48
        $region47: #{step.1} parent=39 // pred_region
          %599 = vsyncadd %s588, 0
          %s600 = scalar_lea.hbm %s5, %s24
          %s602 = sshll.u32 %s590, 4
          %s603 = int_to_ptr.vmem [resolvable:$true] %s602
          %s604 = sshll.u32 %s600, 4
          %s605 = int_to_ptr.hbm [resolvable:$true] %s604
          %607 = dma.vmem_to_hbm [thread:$0]  %s603, 16, %s605, %s588
        $region48: #{step.1} parent=39 // pred_fallthru
          _
        // Predicated region
        $region49: #{step.1} parent=39 // pred_check
          %p608 = pneg %p178
        $region50: #{step.1} parent=39 // pred_check_branch
          %610 = sbr.rel (%p608) target = $region52
        $region51: #{step.1} parent=39 // pred_region
          %612 = vsyncadd %s592, 0
          %s613 = scalar_lea.hbm %s6, %s24
          %s615 = sshll.u32 %s594, 4
          %s616 = int_to_ptr.vmem [resolvable:$true] %s615
          %s617 = sshll.u32 %s613, 4
          %s618 = int_to_ptr.hbm [resolvable:$true] %s617
          %620 = dma.vmem_to_hbm [thread:$0]  %s616, 16, %s618, %s592
        $region52: #{step.1} parent=39 // pred_fallthru
          _
      $region40: #{step.1} parent=5 // pred_fallthru
        _
      %p621 = scmp.le.s32.totalorder 2, %s19
      // Predicated region
      $region53: #{step.1} parent=5 // pred_check
        %p622 = pneg %p621
      $region54: #{step.1} parent=5 // pred_check_branch
        %624 = sbr.rel (%p622) target = $region56
      $region55: #{step.1} parent=5 // pred_region
        %s625 = ssub.s32 %s19, 2
        // Predicated region
        $region57: #{step.1} parent=55 // pred_check
          %p626 = pneg %p158
        $region58: #{step.1} parent=55 // pred_check_branch
          %628 = sbr.rel (%p626) target = $region60
        $region59: #{step.1} parent=55 // pred_region
          %s629 = sand.u32 %s143, 1
          %s630 = scalar_lea.sflag [#allocation5], %s629
          %s631 = sand.u32 %s143, 1
          %s632 = scalar_lea.vmem [#allocation4], %s631
          %634 = dma.done %s630, 16
        $region60: #{step.1} parent=55 // pred_fallthru
          _
        // Predicated region
        $region61: #{step.1} parent=55 // pred_check
          %p635 = pneg %p184
        $region62: #{step.1} parent=55 // pred_check_branch
          %637 = sbr.rel (%p635) target = $region64
        $region63: #{step.1} parent=55 // pred_region
          %s638 = sand.u32 %s169, 1
          %s639 = scalar_lea.sflag [#allocation7], %s638
          %s640 = sand.u32 %s169, 1
          %s641 = scalar_lea.vmem [#allocation6], %s640
          %643 = dma.done %s639, 16
        $region64: #{step.1} parent=55 // pred_fallthru
          _
      $region56: #{step.1} parent=5 // pred_fallthru
        _
    $region6: #{step.1} parent=1 // loop_footer
      %s23 = sadd.s32 1, %s19
    $region7: #{step.1} parent=1 // loop_footer_branch
      %18 = sbr.rel target = $region3
    $region8: #{step.1} parent=1 // loop_exit
      _
    %644 = vsyncpa [#allocation5], 1
    %s645 = scalar_lea.sflag [#allocation5], 1
    %646 = vsyncpa %s645, 1
    %647 = vsyncpa [#allocation7], 1
    %s648 = scalar_lea.sflag [#allocation7], 1
    %649 = vsyncpa %s648, 1

</llo_original>
